<compile_context>
chip_gen: v7x
topology: tpu7x:2x2x1
jax: 0.10.0
libtpu: 0.0.40
codegen_flags: <defaults>
</compile_context>

<pallas_src>
import functools
import math

import jax
import jax.numpy as jnp
from jax import lax
from jax.experimental import pallas as pl
from jax.experimental.pallas import tpu as pltpu

LANES = 128
SUBLANES = 8
TILE_ROWS_MAX = 1024  # (1024, 128) f32 block = 512 KiB -> ~2 MiB double-buffered in+out

# std of the sum of 8 iid Uniform{0..255} bytes.
_INV_STD_8BYTES = 1.0 / math.sqrt(8.0 * (256.0 ** 2 - 1.0) / 12.0)


def _mix32(h):
    """lowbias32 integer finalizer — good avalanche, ~6 VPU ops per word."""
    h = h ^ (h >> 16)
    h = h * jnp.uint32(0x7FEB352D)
    h = h ^ (h >> 15)
    h = h * jnp.uint32(0x846CA68B)
    h = h ^ (h >> 16)
    return h


def _byte_sum(h):
    m = jnp.uint32(0xFF)
    return (h & m) + ((h >> 8) & m) + ((h >> 16) & m) + (h >> 24)


def _gaussian_dropout_kernel(seed_ref, x_ref, o_ref, *, alpha, tile_rows):
    # Unique per-element counter: global (row, lane) index of this tile.
    r, c = x_ref.shape
    row = lax.broadcasted_iota(jnp.int32, (r, c), 0)
    col = lax.broadcasted_iota(jnp.int32, (r, c), 1)
    idx = (pl.program_id(0) * tile_rows + row) * LANES + col
    ctr = idx.astype(jnp.uint32)

    seed = seed_ref[0].astype(jnp.uint32)
    h1 = _mix32(ctr ^ (seed * jnp.uint32(0x9E3779B1)))
    h2 = _mix32(ctr ^ (seed * jnp.uint32(0x85EBCA77)) ^ jnp.uint32(0x68E31DA4))

    # Irwin-Hall: sum of 8 uniform bytes ~ Normal(mean=1020, var=8*(2^16-1)/12).
    s = (_byte_sum(h1) + _byte_sum(h2)).astype(jnp.float32)
    z = (s - jnp.float32(1020.0)) * jnp.float32(_INV_STD_8BYTES)  # ~ N(0, 1)

    x = x_ref[...]
    eps = (z * jnp.float32(alpha) + jnp.float32(1.0)).astype(x.dtype)
    o_ref[...] = x * eps


def gaussian_dropout(x, seed, alpha=1.0, training=True):
    """Pallas forward for GaussianDropout: y = x * (randn_like(x) * alpha + 1)."""
    if not training:
        return x

    orig_shape = x.shape
    total = int(x.size)

    if total % LANES == 0:
        x2 = x.reshape(total // LANES, LANES)
        padded = False
    else:
        # TODO(synk): rare path (x.size not a multiple of 128); jnp.pad adds an
        # extra HBM pass.  The common conv/MLP activation shapes avoid it.
        pad = LANES - total % LANES
        x2 = jnp.pad(x.reshape(-1), (0, pad)).reshape(-1, LANES)
        padded = True

    rows = x2.shape[0]
    tile_rows = min(TILE_ROWS_MAX, ((rows + SUBLANES - 1) // SUBLANES) * SUBLANES)
    grid = (pl.cdiv(rows, tile_rows),)

    seed_arr = jnp.asarray([seed], dtype=jnp.int32)

    out2 = pl.pallas_call(
        functools.partial(
            _gaussian_dropout_kernel, alpha=float(alpha), tile_rows=tile_rows
        ),
        out_shape=jax.ShapeDtypeStruct((rows, LANES), x.dtype),
        grid=grid,
        in_specs=[
            pl.BlockSpec(memory_space=pltpu.MemorySpace.SMEM),   # seed scalar
            pl.BlockSpec((tile_rows, LANES), lambda i: (i, 0)),  # x tiles
        ],
        out_specs=pl.BlockSpec((tile_rows, LANES), lambda i: (i, 0)),
        input_output_aliases={1: 0},
        compiler_params=pltpu.CompilerParams(
            dimension_semantics=("parallel",)
        ),
    )(seed_arr, x2)

    if padded:
        return out2.reshape(-1)[:total].reshape(orig_shape)
    return out2.reshape(orig_shape)


if __name__ == "__main__":
    key = jax.random.PRNGKey(0)
    # Small NCHW activations consistent with the module's elementwise forward.
    x = jax.random.normal(key, (2, 4, 16, 16), dtype=jnp.float32)

    alpha = 1.0
    y_train = jax.block_until_ready(
        gaussian_dropout(x, seed=1234, alpha=alpha, training=True)
    )
    y_eval = jax.block_until_ready(
        gaussian_dropout(x, seed=1234, alpha=alpha, training=False)
    )

    # Basic sanity checks.
    assert y_train.shape == x.shape and y_train.dtype == x.dtype
    assert bool(jnp.isfinite(y_train).all())
    assert bool(jnp.allclose(y_eval, x))

    # Recover eps = y / x where |x| is not tiny; check it looks like N(1, alpha).
    mask = jnp.abs(x) > 1e-1
    eps = jnp.where(mask, y_train / jnp.where(mask, x, 1.0), 0.0)
    n = jnp.sum(mask)
    mean = jnp.sum(eps) / n
    var = jnp.sum(jnp.where(mask, (eps - mean) ** 2, 0.0)) / n
    assert abs(float(mean) - 1.0) < 0.15, float(mean)
    assert abs(float(jnp.sqrt(var)) - alpha) < 0.3, float(jnp.sqrt(var))

    print("KERNEL_OK")
</pallas_src>

<mosaic_0001>
module attributes {stable_mosaic.version = 11 : i64} {
  func.func @_gaussian_dropout_kernel(%arg0: i32, %arg1: memref<1xi32, #tpu.memory_space<smem>>, %arg2: memref<16x128xf32, #tpu.memory_space<vmem>>, %arg3: memref<16x128xf32, #tpu.memory_space<vmem>>) attributes {dimension_semantics = [#tpu.dimension_semantics<parallel>], iteration_bounds = array<i64: 1>, scalar_prefetch = 0 : i64, scratch_operands = 0 : i64, tpu.core_type = #tpu.core_type<tc>, window_params = [{transform_indices = @transform_0, window_bounds = array<i64: 1>}, {transform_indices = @transform_1, window_bounds = array<i64: 16, 128>}, {transform_indices = @transform_2, window_bounds = array<i64: 16, 128>}]} {
    %0 = tpu.iota {dimensions = array<i32: 0>} : vector<16x128xi32>
    %1 = tpu.iota {dimensions = array<i32: 1>} : vector<16x128xi32>
    %c16_i32 = arith.constant 16 : i32
    %2 = arith.muli %arg0, %c16_i32 : i32
    %3 = vector.broadcast %2 : i32 to vector<16x128xi32>
    %4 = arith.addi %3, %0 : vector<16x128xi32>
    %c128_i32 = arith.constant 128 : i32
    %5 = vector.broadcast %c128_i32 : i32 to vector<16x128xi32>
    %6 = arith.muli %4, %5 : vector<16x128xi32>
    %7 = arith.addi %6, %1 : vector<16x128xi32>
    %c0 = arith.constant 0 : index
    %8 = memref.load %arg1[%c0] : memref<1xi32, #tpu.memory_space<smem>>
    %c-1640531535_i32 = arith.constant -1640531535 : i32
    %9 = arith.muli %8, %c-1640531535_i32 : i32
    %10 = vector.broadcast %9 : i32 to vector<16x128xi32>
    %11 = arith.xori %7, %10 : vector<16x128xi32>
    %c16_i32_0 = arith.constant 16 : i32
    %12 = vector.broadcast %c16_i32_0 : i32 to vector<16x128xi32>
    %13 = arith.shrui %11, %12 : vector<16x128xi32>
    %14 = arith.xori %11, %13 : vector<16x128xi32>
    %c2146121005_i32 = arith.constant 2146121005 : i32
    %15 = vector.broadcast %c2146121005_i32 : i32 to vector<16x128xi32>
    %16 = arith.muli %14, %15 : vector<16x128xi32>
    %c15_i32 = arith.constant 15 : i32
    %17 = vector.broadcast %c15_i32 : i32 to vector<16x128xi32>
    %18 = arith.shrui %16, %17 : vector<16x128xi32>
    %19 = arith.xori %16, %18 : vector<16x128xi32>
    %c-2073254261_i32 = arith.constant -2073254261 : i32
    %20 = vector.broadcast %c-2073254261_i32 : i32 to vector<16x128xi32>
    %21 = arith.muli %19, %20 : vector<16x128xi32>
    %c16_i32_1 = arith.constant 16 : i32
    %22 = vector.broadcast %c16_i32_1 : i32 to vector<16x128xi32>
    %23 = arith.shrui %21, %22 : vector<16x128xi32>
    %24 = arith.xori %21, %23 : vector<16x128xi32>
    %c-2048144777_i32 = arith.constant -2048144777 : i32
    %25 = arith.muli %8, %c-2048144777_i32 : i32
    %26 = vector.broadcast %25 : i32 to vector<16x128xi32>
    %27 = arith.xori %7, %26 : vector<16x128xi32>
    %c1759714724_i32 = arith.constant 1759714724 : i32
    %28 = vector.broadcast %c1759714724_i32 : i32 to vector<16x128xi32>
    %29 = arith.xori %27, %28 : vector<16x128xi32>
    %c16_i32_2 = arith.constant 16 : i32
    %30 = vector.broadcast %c16_i32_2 : i32 to vector<16x128xi32>
    %31 = arith.shrui %29, %30 : vector<16x128xi32>
    %32 = arith.xori %29, %31 : vector<16x128xi32>
    %c2146121005_i32_3 = arith.constant 2146121005 : i32
    %33 = vector.broadcast %c2146121005_i32_3 : i32 to vector<16x128xi32>
    %34 = arith.muli %32, %33 : vector<16x128xi32>
    %c15_i32_4 = arith.constant 15 : i32
    %35 = vector.broadcast %c15_i32_4 : i32 to vector<16x128xi32>
    %36 = arith.shrui %34, %35 : vector<16x128xi32>
    %37 = arith.xori %34, %36 : vector<16x128xi32>
    %c-2073254261_i32_5 = arith.constant -2073254261 : i32
    %38 = vector.broadcast %c-2073254261_i32_5 : i32 to vector<16x128xi32>
    %39 = arith.muli %37, %38 : vector<16x128xi32>
    %c16_i32_6 = arith.constant 16 : i32
    %40 = vector.broadcast %c16_i32_6 : i32 to vector<16x128xi32>
    %41 = arith.shrui %39, %40 : vector<16x128xi32>
    %42 = arith.xori %39, %41 : vector<16x128xi32>
    %c255_i32 = arith.constant 255 : i32
    %43 = vector.broadcast %c255_i32 : i32 to vector<16x128xi32>
    %44 = arith.andi %24, %43 : vector<16x128xi32>
    %c8_i32 = arith.constant 8 : i32
    %45 = vector.broadcast %c8_i32 : i32 to vector<16x128xi32>
    %46 = arith.shrui %24, %45 : vector<16x128xi32>
    %c255_i32_7 = arith.constant 255 : i32
    %47 = vector.broadcast %c255_i32_7 : i32 to vector<16x128xi32>
    %48 = arith.andi %46, %47 : vector<16x128xi32>
    %49 = arith.addi %44, %48 : vector<16x128xi32>
    %c16_i32_8 = arith.constant 16 : i32
    %50 = vector.broadcast %c16_i32_8 : i32 to vector<16x128xi32>
    %51 = arith.shrui %24, %50 : vector<16x128xi32>
    %c255_i32_9 = arith.constant 255 : i32
    %52 = vector.broadcast %c255_i32_9 : i32 to vector<16x128xi32>
    %53 = arith.andi %51, %52 : vector<16x128xi32>
    %54 = arith.addi %49, %53 : vector<16x128xi32>
    %c24_i32 = arith.constant 24 : i32
    %55 = vector.broadcast %c24_i32 : i32 to vector<16x128xi32>
    %56 = arith.shrui %24, %55 : vector<16x128xi32>
    %57 = arith.addi %54, %56 : vector<16x128xi32>
    %c255_i32_10 = arith.constant 255 : i32
    %58 = vector.broadcast %c255_i32_10 : i32 to vector<16x128xi32>
    %59 = arith.andi %42, %58 : vector<16x128xi32>
    %c8_i32_11 = arith.constant 8 : i32
    %60 = vector.broadcast %c8_i32_11 : i32 to vector<16x128xi32>
    %61 = arith.shrui %42, %60 : vector<16x128xi32>
    %c255_i32_12 = arith.constant 255 : i32
    %62 = vector.broadcast %c255_i32_12 : i32 to vector<16x128xi32>
    %63 = arith.andi %61, %62 : vector<16x128xi32>
    %64 = arith.addi %59, %63 : vector<16x128xi32>
    %c16_i32_13 = arith.constant 16 : i32
    %65 = vector.broadcast %c16_i32_13 : i32 to vector<16x128xi32>
    %66 = arith.shrui %42, %65 : vector<16x128xi32>
    %c255_i32_14 = arith.constant 255 : i32
    %67 = vector.broadcast %c255_i32_14 : i32 to vector<16x128xi32>
    %68 = arith.andi %66, %67 : vector<16x128xi32>
    %69 = arith.addi %64, %68 : vector<16x128xi32>
    %c24_i32_15 = arith.constant 24 : i32
    %70 = vector.broadcast %c24_i32_15 : i32 to vector<16x128xi32>
    %71 = arith.shrui %42, %70 : vector<16x128xi32>
    %72 = arith.addi %69, %71 : vector<16x128xi32>
    %73 = arith.addi %57, %72 : vector<16x128xi32>
    %74 = arith.uitofp %73 : vector<16x128xi32> to vector<16x128xf32>
    %cst = arith.constant 1.020000e+03 : f32
    %75 = vector.broadcast %cst : f32 to vector<16x128xf32>
    %76 = arith.subf %74, %75 : vector<16x128xf32>
    %cst_16 = arith.constant 0.00478419615 : f32
    %77 = vector.broadcast %cst_16 : f32 to vector<16x128xf32>
    %78 = arith.mulf %76, %77 : vector<16x128xf32>
    %c0_17 = arith.constant 0 : index
    %c0_18 = arith.constant 0 : index
    %79 = vector.load %arg2[%c0_17, %c0_18] : memref<16x128xf32, #tpu.memory_space<vmem>>, vector<16x128xf32>
    %cst_19 = arith.constant 1.000000e+00 : f32
    %80 = vector.broadcast %cst_19 : f32 to vector<16x128xf32>
    %81 = arith.mulf %78, %80 : vector<16x128xf32>
    %cst_20 = arith.constant 1.000000e+00 : f32
    %82 = vector.broadcast %cst_20 : f32 to vector<16x128xf32>
    %83 = arith.addf %81, %82 : vector<16x128xf32>
    %84 = arith.mulf %79, %83 : vector<16x128xf32>
    %c0_21 = arith.constant 0 : index
    %c0_22 = arith.constant 0 : index
    %85 = vector.load %arg3[%c0_21, %c0_22] : memref<16x128xf32, #tpu.memory_space<vmem>>, vector<16x128xf32>
    tpu.vector_store %arg3[%c0_21, %c0_22], %84 {strides = array<i32>} : memref<16x128xf32, #tpu.memory_space<vmem>>, vector<16x128xf32>,
    return
  }
  func.func @transform_0(%arg0: i32) -> i32 {
    %c0_i32 = arith.constant 0 : i32
    %c0_i32_0 = arith.constant 0 : i32
    return %c0_i32 : i32
  }
  func.func @transform_1(%arg0: i32) -> (i32, i32) {
    %c0_i32 = arith.constant 0 : i32
    %c0_i32_0 = arith.constant 0 : i32
    return %arg0, %c0_i32 : i32, i32
  }
  func.func @transform_2(%arg0: i32) -> (i32, i32) {
    %c0_i32 = arith.constant 0 : i32
    %c0_i32_0 = arith.constant 0 : i32
    return %arg0, %c0_i32 : i32, i32
  }
}

</mosaic_0001>

<llo_original>
// kernel: tpu_custom_call.1
$region0: #{tpu_custom_call.1}
  #allocation0 [shape = 'u32[]', space=smem, size = 0x4, offset = 0x4, fixed_abs, tag = 'smem constant byte address 0x4 - core index']
  #allocation1 [shape = 'u32[144,128]{1,0:T(1,128)}', space=vmem, size = 0x12000, scoped, tag = 'internal scratch']
  #allocation2 [shape = 's32[1]{0:T(128)S(6)}', space=smem, size = 0x200, scoped, tag = 'scoped memory for tpu_custom_call.1']
  %s0 = inlined_call_operand.<no memory space> [shape: s32[1], index: 0, kind: input, shape index: {}]
  %s1 = inlined_call_operand.hbm [shape: f32[16,128], index: 1, kind: input, shape index: {}, may-alias: {1,2}]
  %s2 = inlined_call_operand.hbm [shape: f32[16,128], index: 2, kind: output, shape index: {}, may-alias: {1,2}]
  %s3 = sld [smem:[#allocation0]]
  $region22: #{tpu_custom_call.1} parent=0
    _
  %s5 = ssub.s32 1, %s3
  %s6 = scalar_select 0, %s5, %s3
  %7 = sst [smem:[#allocation2]] %s0
  $region1: #{tpu_custom_call.1} parent=0
    #allocation3 [shape = 'u8[8192]{0}', space=vmem, size = 0x2000, scoped, tag = 'input window, operand 1, single buffered']
    #allocation4 [shape = 's32[1]{0}', space=sflag, size = 0x4, scoped, tag = 'scoped memory for tpu_custom_call.1']
    #allocation5 [shape = 's32[1]{0}', space=sflag, size = 0x4, scoped, tag = 'scoped memory for tpu_custom_call.1']
    #allocation6 [shape = 'u8[8192]{0}', space=vmem, size = 0x2000, scoped, tag = 'output window, operand 0, single buffered']
    %8 = vsyncpa [#allocation4], 0
    %9 = vsyncpa [#allocation5], 0
    // Predicated region
    $region2: #{tpu_custom_call.1} parent=1 // pred_check
      _
    $region3: #{tpu_custom_call.1} parent=1 // pred_check_branch
      %11 = sbr.rel (0) target = $region5
    $region4: #{tpu_custom_call.1} parent=1 // pred_region
      _
    $region5: #{tpu_custom_call.1} parent=1 // pred_fallthru
      _
    // Predicated region
    $region6: #{tpu_custom_call.1} parent=1 // pred_check
      _
    $region7: #{tpu_custom_call.1} parent=1 // pred_check_branch
      %13 = sbr.rel (0) target = $region9
    $region8: #{tpu_custom_call.1} parent=1 // pred_region
      %s15 = ssub.s32 256, 256
      %16 = vsyncadd [#allocation4], %s15
      %s17 = sshll.u32 [#allocation3], 4
      %s18 = int_to_ptr.vmem [resolvable:$true] %s17
      %23 = dma.hbm_to_vmem [thread:$0]  %s1, 256, %s18, [#allocation4], 128, 128, 8
    $region9: #{tpu_custom_call.1} parent=1 // pred_fallthru
      _
    // Predicated region
    $region10: #{tpu_custom_call.1} parent=1 // pred_check
      _
    $region11: #{tpu_custom_call.1} parent=1 // pred_check_branch
      %25 = sbr.rel (0) target = $region13
    $region12: #{tpu_custom_call.1} parent=1 // pred_region
      %26 = dma.done [#allocation4], 256
    $region13: #{tpu_custom_call.1} parent=1 // pred_fallthru
      _
    %v27 = vlaneseq
    %v28 = vshrl.u32 %v27, 7
    %v29 = vadd.s32 %v28, 8
    %v30 = vlaneseq
    %v31 = vand.u32 %v30, 127
    %s32 = smul.u32 0, 16
    %v33 = vstv %s32
    %v34 = vadd.s32 %v33, %v28
    %v35 = vadd.s32 %v33, %v29
    %v36 = vmul.u32 %v34, 128
    %v37 = vmul.u32 %v35, 128
    %v38 = vadd.s32 %v36, %v31
    %v39 = vadd.s32 %v37, %v31
    %s40 = sld [smem:[#allocation2]]
    %s41 = smul.u32 %s40, 2654435761
    %v42 = vstv %s41
    %v43 = vxor.u32 %v38, %v42
    %v44 = vxor.u32 %v39, %v42
    %v45 = vshrl.u32 %v43, 16
    %v46 = vshrl.u32 %v44, 16
    %v47 = vxor.u32 %v43, %v45
    %v48 = vxor.u32 %v44, %v46
    %v49 = vmul.u32 %v47, 2146121005
    %v50 = vmul.u32 %v48, 2146121005
    %v51 = vshrl.u32 %v49, 15
    %v52 = vshrl.u32 %v50, 15
    %v53 = vxor.u32 %v49, %v51
    %v54 = vxor.u32 %v50, %v52
    %v55 = vmul.u32 %v53, 2221713035
    %v56 = vmul.u32 %v54, 2221713035
    %v57 = vshrl.u32 %v55, 16
    %v58 = vshrl.u32 %v56, 16
    %v59 = vxor.u32 %v55, %v57
    %v60 = vxor.u32 %v56, %v58
    %s61 = smul.u32 %s40, 2246822519
    %v62 = vstv %s61
    %v63 = vxor.u32 %v38, %v62
    %v64 = vxor.u32 %v39, %v62
    %v65 = vxor.u32 %v63, 1759714724
    %v66 = vxor.u32 %v64, 1759714724
    %v67 = vshrl.u32 %v65, 16
    %v68 = vshrl.u32 %v66, 16
    %v69 = vxor.u32 %v65, %v67
    %v70 = vxor.u32 %v66, %v68
    %v71 = vmul.u32 %v69, 2146121005
    %v72 = vmul.u32 %v70, 2146121005
    %v73 = vshrl.u32 %v71, 15
    %v74 = vshrl.u32 %v72, 15
    %v75 = vxor.u32 %v71, %v73
    %v76 = vxor.u32 %v72, %v74
    %v77 = vmul.u32 %v75, 2221713035
    %v78 = vmul.u32 %v76, 2221713035
    %v79 = vshrl.u32 %v77, 16
    %v80 = vshrl.u32 %v78, 16
    %v81 = vxor.u32 %v77, %v79
    %v82 = vxor.u32 %v78, %v80
    %v83 = vand.u32 %v59, 255
    %v84 = vand.u32 %v60, 255
    %v85 = vshrl.u32 %v59, 8
    %v86 = vshrl.u32 %v60, 8
    %v87 = vand.u32 %v85, 255
    %v88 = vand.u32 %v86, 255
    %v89 = vadd.s32 %v83, %v87
    %v90 = vadd.s32 %v84, %v88
    %v91 = vshrl.u32 %v59, 16
    %v92 = vshrl.u32 %v60, 16
    %v93 = vand.u32 %v91, 255
    %v94 = vand.u32 %v92, 255
    %v95 = vadd.s32 %v89, %v93
    %v96 = vadd.s32 %v90, %v94
    %v97 = vshrl.u32 %v59, 24
    %v98 = vshrl.u32 %v60, 24
    %v99 = vadd.s32 %v95, %v97
    %v100 = vadd.s32 %v96, %v98
    %v101 = vand.u32 %v81, 255
    %v102 = vand.u32 %v82, 255
    %v103 = vshrl.u32 %v81, 8
    %v104 = vshrl.u32 %v82, 8
    %v105 = vand.u32 %v103, 255
    %v106 = vand.u32 %v104, 255
    %v107 = vadd.s32 %v101, %v105
    %v108 = vadd.s32 %v102, %v106
    %v109 = vshrl.u32 %v81, 16
    %v110 = vshrl.u32 %v82, 16
    %v111 = vand.u32 %v109, 255
    %v112 = vand.u32 %v110, 255
    %v113 = vadd.s32 %v107, %v111
    %v114 = vadd.s32 %v108, %v112
    %v115 = vshrl.u32 %v81, 24
    %v116 = vshrl.u32 %v82, 24
    %v117 = vadd.s32 %v113, %v115
    %v118 = vadd.s32 %v114, %v116
    %v119 = vadd.s32 %v99, %v117
    %v120 = vadd.s32 %v100, %v118
    %v121 = vshrl.u32 %v119, 16
    %v122 = vand.u32 %v119, 65535
    %v123 = vcvt.s32.f32 %v121
    %v124 = vmul.f32 %v123, 65536.0
    %v125 = vcvt.s32.f32 %v122
    %v126 = vadd.f32 %v124, %v125
    %v127 = vshrl.u32 %v120, 16
    %v128 = vand.u32 %v120, 65535
    %v129 = vcvt.s32.f32 %v127
    %v130 = vmul.f32 %v129, 65536.0
    %v131 = vcvt.s32.f32 %v128
    %v132 = vadd.f32 %v130, %v131
    %v133 = vsub.f32 %v126, 1020.0
    %v134 = vsub.f32 %v132, 1020.0
    %v135 = vmul.f32 %v133, 0.004784196
    %v136 = vmul.f32 %v134, 0.004784196
    %v137 = vld [vmem:[#allocation3] sm:$0xff]
    %v138 = vld [vmem:[#allocation3 + $0x8] sm:$0xff]
    %v139 = vadd.f32 %v135, 1.0
    %v140 = vadd.f32 %v136, 1.0
    %v141 = vmul.f32 %v137, %v139
    %v142 = vmul.f32 %v138, %v140
    %143 = vst [vmem:[#allocation6] sm:$0xff] %v141
    %144 = vst [vmem:[#allocation6 + $0x8] sm:$0xff] %v142
    // Predicated region
    $region14: #{tpu_custom_call.1} parent=1 // pred_check
      _
    $region15: #{tpu_custom_call.1} parent=1 // pred_check_branch
      %146 = sbr.rel (0) target = $region17
    $region16: #{tpu_custom_call.1} parent=1 // pred_region
      %s148 = ssub.s32 256, 256
      %149 = vsyncadd [#allocation5], %s148
      %s150 = sshll.u32 [#allocation6], 4
      %s151 = int_to_ptr.vmem [resolvable:$true] %s150
      %156 = dma.vmem_to_hbm [thread:$0]  %s151, 256, %s2, [#allocation5], 128, 128, 8
    $region17: #{tpu_custom_call.1} parent=1 // pred_fallthru
      _
    // Predicated region
    $region18: #{tpu_custom_call.1} parent=1 // pred_check
      _
    $region19: #{tpu_custom_call.1} parent=1 // pred_check_branch
      %158 = sbr.rel (0) target = $region21
    $region20: #{tpu_custom_call.1} parent=1 // pred_region
      %159 = dma.done [#allocation5], 256
    $region21: #{tpu_custom_call.1} parent=1 // pred_fallthru
      _
    %160 = vsyncpa [#allocation4], 1
    %161 = vsyncpa [#allocation5], 1

</llo_original>
